<compile_context>
chip_gen: v6e
topology: v6e:2x2x1
jax: 0.10.0
libtpu: 0.0.40
codegen_flags: <defaults>
</compile_context>

<pallas_src>
import jax
import jax.numpy as jnp
from jax.experimental import pallas as pl
from jax.experimental.pallas import tpu as pltpu


def _round_up(n, m):
    return ((n + m - 1) // m) * m


def _vmem_capacity_bytes():
    """Best-effort per-core VMEM capacity; conservative (v7x) fallback."""
    try:
        info = pltpu.get_tpu_info()
        cap = getattr(info, "vmem_capacity_bytes", None)
        if cap:
            return int(cap)
    except Exception:
        pass
    return 64 * 1024 * 1024  # v7x has the smallest VMEM of current generations


def mlp_kernel(xt_ref, w1t_ref, b1_ref, w2_ref, b2_ref, o_ref):
    # xt_ref : (14, TB)  streamed batch tile of x^T (lane-dense)
    # w1t_ref: (64, 14)  fc1 weight (out x in), resident in VMEM
    # b1_ref : (64, 1)   fc1 bias column, resident
    # w2_ref : (64, 1)   fc2 weight column, resident
    # b2_ref : (1,)      fc2 bias, SMEM scalar
    # o_ref  : (1, TB)   lane-dense output row (unmasked vector stores)

    # fc1 on the MXU with f32 accumulation: h[c, n] = sum_f w1[f, c] * x[n, f].
    h = jnp.dot(w1t_ref[...], xt_ref[...], preferred_element_type=jnp.float32)
    h = jnp.maximum(h + b1_ref[...], 0.0)            # bias + ReLU on the VPU

    # fc2 (out_features == 1): weighted reduction over the 64 hidden channels.
    # This is a sublane (second-minor) reduction -> cheap VPU adds plus one
    # intra-vreg reduce, and the (1, TB) result is already lane-dense, so no
    # relayout is needed before the store.
    y = jnp.sum(h * w2_ref[...], axis=0, keepdims=True) + b2_ref[0]
    o_ref[...] = y.astype(o_ref.dtype)


def mlp_forward_xt(x_t, w1, b1, w2, b2, *, block_b=8192, use_bf16=False):
    """MLP forward from a pre-transposed input x_t of shape (14, B) -> (B, 1)."""
    F, B = x_t.shape
    assert F == 14 and w1.shape == (14, 64) and w2.shape == (64, 1)

    # ---- batch tile selection (generation-aware) --------------------------
    # Streamed, double-buffered VMEM cost per batch element (sublane-padded):
    #   x^T block: 16 sublanes * elt_bytes     out block: 8 sublanes * 4 B
    elt_bytes = 2 if use_bf16 else 4
    bytes_per_elem = 2 * (16 * elt_bytes) + 2 * (8 * 4)
    vmem_cap = _vmem_capacity_bytes()
    tb_vmem_cap = max(128, ((vmem_cap // 4) // bytes_per_elem) // 128 * 128)

    tb = _round_up(max(block_b, 128), 128)
    tb = min(tb, tb_vmem_cap)
    if B > 128:
        # Keep at least two batch tiles so the "parallel" axis can shard
        # across both v7x TensorCores (neutral on 1-TC v5e/v6e).
        tb = min(tb, _round_up(pl.cdiv(B, 2), 128))
    tb = max(tb, 128)
    grid_b = pl.cdiv(B, tb)   # partial last block when tb does not divide B

    # ---- operand layouts ---------------------------------------------------
    in_dtype = jnp.bfloat16 if use_bf16 else jnp.float32
    x_t = x_t.astype(in_dtype)
    w1_t = jnp.transpose(w1).astype(in_dtype)          # (64, 14), tiny, resident
    b1_col = b1.reshape(64, 1).astype(jnp.float32)
    w2_col = w2.reshape(64, 1).astype(jnp.float32)
    b2_s = b2.reshape(1).astype(jnp.float32)

    # Explicit scoped-VMEM limit: large tiles can exceed the 16 MiB default on
    # v5e; stay well under v7x's 64 MiB physical VMEM.
    vmem_need = bytes_per_elem * tb + (64 * 1024)
    vmem_limit = min(max(32 << 20, vmem_need + (4 << 20)), 48 << 20)

    out = pl.pallas_call(
        mlp_kernel,
        out_shape=jax.ShapeDtypeStruct((1, grid_b * tb), jnp.float32),
        grid_spec=pltpu.PrefetchScalarGridSpec(
            num_scalar_prefetch=0,
            grid=(grid_b,),
            in_specs=[
                # x^T streamed per tile: lane-dense DMA, double-buffered by the
                # BlockSpec pipeline.  (Add pipeline_mode=pl.Buffered(3) here
                # only if profiling still shows exposed input DMA.)
                pl.BlockSpec((14, tb), lambda i: (0, i)),
                pl.BlockSpec((64, 14), lambda i: (0, 0)),   # w1^T resident
                pl.BlockSpec((64, 1), lambda i: (0, 0)),    # b1 resident
                pl.BlockSpec((64, 1), lambda i: (0, 0)),    # w2 resident
                pl.BlockSpec(memory_space=pltpu.MemorySpace.SMEM),  # b2 scalar
            ],
            out_specs=pl.BlockSpec((1, tb), lambda i: (0, i)),
        ),
        compiler_params=pltpu.CompilerParams(
            dimension_semantics=("parallel",),
            vmem_limit_bytes=vmem_limit,
        ),
    )(x_t, w1_t, b1_col, w2_col, b2_s)

    # (1, grid_b*tb) -> (B, 1); lanes past B (partial last block) are dropped.
    return out.reshape(-1)[:B].reshape(B, 1)


def mlp_forward(x, w1, b1, w2, b2, *, block_b=8192, use_bf16=False):
    """Torch-semantics entry point: x of shape (B, 14) -> (B, 1).

    Best HBM efficiency is obtained by producing x already transposed (14, B)
    upstream and calling mlp_forward_xt directly; this wrapper pays one extra
    relayout pass over x.
    """
    return mlp_forward_xt(jnp.transpose(x), w1, b1, w2, b2,
                          block_b=block_b, use_bf16=use_bf16)


def init_params(key):
    # Mimic torch.nn.Linear default init: U(-1/sqrt(fan_in), +1/sqrt(fan_in)).
    k1, k2, k3, k4 = jax.random.split(key, 4)
    bound1 = 1.0 / jnp.sqrt(14.0)
    bound2 = 1.0 / jnp.sqrt(64.0)
    w1 = jax.random.uniform(k1, (14, 64), jnp.float32, -bound1, bound1)
    b1 = jax.random.uniform(k2, (64,), jnp.float32, -bound1, bound1)
    w2 = jax.random.uniform(k3, (64, 1), jnp.float32, -bound2, bound2)
    b2 = jax.random.uniform(k4, (1,), jnp.float32, -bound2, bound2)
    return w1, b1, w2, b2


if __name__ == "__main__":
    key = jax.random.PRNGKey(0)
    k_params, k_x = jax.random.split(key)
    w1, b1, w2, b2 = init_params(k_params)

    # Small demo batch; 1000 is not a multiple of the tile, so the pad-free
    # partial-last-block path is exercised.
    B = 1000
    x = jax.random.normal(k_x, (B, 14), jnp.float32)

    # Pure-JAX reference of the PyTorch forward: relu(x @ W1 + b1) @ W2 + b2.
    ref = jnp.maximum(x @ w1 + b1, 0.0) @ w2 + b2

    # Default tiles (TB bounded so both v7x cores get a tile: G == 2 here).
    out = jax.block_until_ready(mlp_forward(x, w1, b1, w2, b2))
    assert out.shape == (B, 1)
    assert jnp.allclose(out, ref, atol=1e-4, rtol=1e-5)

    # Small-tile path: several grid steps plus a partial final block.
    out_small = jax.block_until_ready(mlp_forward(x, w1, b1, w2, b2, block_b=256))
    assert jnp.allclose(out_small, ref, atol=1e-4, rtol=1e-5)

    print("KERNEL_OK")
</pallas_src>

<mosaic_0001>
module attributes {stable_mosaic.version = 11 : i64} {
  func.func @mlp_kernel(%arg0: i32, %arg1: memref<14x512xf32, #tpu.memory_space<vmem>>, %arg2: memref<64x14xf32, #tpu.memory_space<vmem>>, %arg3: memref<64x1xf32, #tpu.memory_space<vmem>>, %arg4: memref<64x1xf32, #tpu.memory_space<vmem>>, %arg5: memref<1xf32, #tpu.memory_space<smem>>, %arg6: memref<1x512xf32, #tpu.memory_space<vmem>>) attributes {dimension_semantics = [#tpu.dimension_semantics<parallel>], iteration_bounds = array<i64: 2>, scalar_prefetch = 0 : i64, scratch_operands = 0 : i64, tpu.core_type = #tpu.core_type<tc>, window_params = [{transform_indices = @transform_0, window_bounds = array<i64: 14, 512>}, {pipeline_mode = #tpu.pipeline_mode<synchronous>, transform_indices = @transform_1, window_bounds = array<i64: 64, 14>}, {pipeline_mode = #tpu.pipeline_mode<synchronous>, transform_indices = @transform_2, window_bounds = array<i64: 64, 1>}, {pipeline_mode = #tpu.pipeline_mode<synchronous>, transform_indices = @transform_3, window_bounds = array<i64: 64, 1>}, {transform_indices = @transform_4, window_bounds = array<i64: 1>}, {transform_indices = @transform_5, window_bounds = array<i64: 1, 512>}]} {
    %c0 = arith.constant 0 : index
    %c0_0 = arith.constant 0 : index
    %0 = vector.load %arg2[%c0, %c0_0] : memref<64x14xf32, #tpu.memory_space<vmem>>, vector<64x14xf32>
    %c0_1 = arith.constant 0 : index
    %c0_2 = arith.constant 0 : index
    %1 = vector.load %arg1[%c0_1, %c0_2] : memref<14x512xf32, #tpu.memory_space<vmem>>, vector<14x512xf32>
    %cst = arith.constant dense<0.000000e+00> : vector<64x512xf32>
    %2 = tpu.matmul %0, %1, %cst {dimension_numbers = #tpu.dot_dimension_numbers<[1], [0], [0], [1], [0, 0, 1, 1], [], []>} : vector<64x14xf32>, vector<14x512xf32>, vector<64x512xf32> -> vector<64x512xf32>
    %c0_3 = arith.constant 0 : index
    %c0_4 = arith.constant 0 : index
    %3 = vector.load %arg3[%c0_3, %c0_4] : memref<64x1xf32, #tpu.memory_space<vmem>>, vector<64x1xf32>
    %4 = vector.broadcast %3 : vector<64x1xf32> to vector<64x512xf32>
    %5 = arith.addf %2, %4 : vector<64x512xf32>
    %cst_5 = arith.constant 0.000000e+00 : f32
    %6 = vector.broadcast %cst_5 : f32 to vector<64x512xf32>
    %7 = arith.maximumf %5, %6 : vector<64x512xf32>
    %c0_6 = arith.constant 0 : index
    %c0_7 = arith.constant 0 : index
    %8 = vector.load %arg4[%c0_6, %c0_7] : memref<64x1xf32, #tpu.memory_space<vmem>>, vector<64x1xf32>
    %9 = vector.broadcast %8 : vector<64x1xf32> to vector<64x512xf32>
    %10 = arith.mulf %7, %9 : vector<64x512xf32>
    %cst_8 = arith.constant dense<0.000000e+00> : vector<512xf32>
    %11 = vector.multi_reduction <add>, %10, %cst_8 [0] : vector<64x512xf32> to vector<512xf32>
    %12 = vector.shape_cast %11 : vector<512xf32> to vector<1x512xf32>
    %c0_9 = arith.constant 0 : index
    %13 = memref.load %arg5[%c0_9] : memref<1xf32, #tpu.memory_space<smem>>
    %14 = vector.broadcast %13 : f32 to vector<1x512xf32>
    %15 = arith.addf %12, %14 : vector<1x512xf32>
    %c0_10 = arith.constant 0 : index
    %c0_11 = arith.constant 0 : index
    %16 = vector.load %arg6[%c0_10, %c0_11] : memref<1x512xf32, #tpu.memory_space<vmem>>, vector<1x512xf32>
    tpu.vector_store %arg6[%c0_10, %c0_11], %15 {strides = array<i32>} : memref<1x512xf32, #tpu.memory_space<vmem>>, vector<1x512xf32>,
    return
  }
  func.func @transform_0(%arg0: i32) -> (i32, i32) {
    %c0_i32 = arith.constant 0 : i32
    %c0_i32_0 = arith.constant 0 : i32
    return %c0_i32, %arg0 : i32, i32
  }
  func.func @transform_1(%arg0: i32) -> (i32, i32) {
    %c0_i32 = arith.constant 0 : i32
    %c0_i32_0 = arith.constant 0 : i32
    %c0_i32_1 = arith.constant 0 : i32
    return %c0_i32, %c0_i32_0 : i32, i32
  }
  func.func @transform_2(%arg0: i32) -> (i32, i32) {
    %c0_i32 = arith.constant 0 : i32
    %c0_i32_0 = arith.constant 0 : i32
    %c0_i32_1 = arith.constant 0 : i32
    return %c0_i32, %c0_i32_0 : i32, i32
  }
  func.func @transform_3(%arg0: i32) -> (i32, i32) {
    %c0_i32 = arith.constant 0 : i32
    %c0_i32_0 = arith.constant 0 : i32
    %c0_i32_1 = arith.constant 0 : i32
    return %c0_i32, %c0_i32_0 : i32, i32
  }
  func.func @transform_4(%arg0: i32) -> i32 {
    %c0_i32 = arith.constant 0 : i32
    %c0_i32_0 = arith.constant 0 : i32
    return %c0_i32 : i32
  }
  func.func @transform_5(%arg0: i32) -> (i32, i32) {
    %c0_i32 = arith.constant 0 : i32
    %c0_i32_0 = arith.constant 0 : i32
    return %c0_i32, %arg0 : i32, i32
  }
}

</mosaic_0001>

<llo_original>
// kernel: tpu_custom_call.1
$region0: #{tpu_custom_call.1}
  #allocation0 [shape = 'u32[]', space=smem, size = 0x4, offset = 0x4, fixed_abs, tag = 'smem constant byte address 0x4 - core index']
  #allocation1 [shape = 'u32[144,128]{1,0:T(1,128)}', space=vmem, size = 0x12000, scoped, tag = 'internal scratch']
  #allocation2 [shape = 'f32[1]{0:T(128)S(6)}', space=smem, size = 0x200, scoped, tag = 'scoped memory for tpu_custom_call.1']
  %s0 = inlined_call_operand.vmem [shape: f32[14,1000], index: 0, kind: input, shape index: {}]
  %s1 = inlined_call_operand.vmem [shape: f32[64,14], index: 1, kind: input, shape index: {}]
  %s2 = inlined_call_operand.vmem [shape: f32[64,1], index: 2, kind: input, shape index: {}]
  %s3 = inlined_call_operand.vmem [shape: f32[64,1], index: 3, kind: input, shape index: {}]
  %s4 = inlined_call_operand.<no memory space> [shape: f32[1], index: 4, kind: input, shape index: {}]
  %s5 = inlined_call_operand.hbm [shape: f32[1,1024], index: 5, kind: output, shape index: {}]
  %s6 = sld [smem:[#allocation0]]
  $region76: #{tpu_custom_call.1} parent=0
    _
  %s8 = ssub.s32 1, %s6
  %s9 = scalar_select 0, %s8, %s6
  %10 = sst [smem:[#allocation2]] %s4
  $region1: #{tpu_custom_call.1} parent=0
    #allocation3 [shape = 'u8[65536]{0}', space=vmem, size = 0x10000, scoped, tag = 'input window, operand 0']
    #allocation4 [shape = 'u8[4096]{0}', space=vmem, size = 0x1000, scoped, tag = 'output window, operand 0']
    #allocation5 [shape = 's32[2]{0}', space=sflag, size = 0x8, scoped, tag = 'scoped memory for tpu_custom_call.1']
    %11 = vsyncpa [#allocation5], 0
    %s12 = scalar_lea.sflag [#allocation5], 1
    %13 = vsyncpa %s12, 0
    loop: start=0, step=1, limit=4
    $region2: #{tpu_custom_call.1} parent=1 // loop_pre_header
      _
    $region3: #{tpu_custom_call.1} parent=1 // loop_header
      %s15 = sphi 0, %s19
      %p16 = scmp.ge.s32.totalorder %s15, 4
      %s25 = sphi 0, %s27
      %s28 = sphi 0, %s25
      %s29 = sphi 0, %s28
      %s45 = sphi 0, %s29
      %s49 = sphi 0, %s49
      %s51 = sphi 0, %s49
      %s52 = sphi 0, %s51
      %s66 = sphi 0, %s52
      %s70 = sphi 0, %s70
      %s72 = sphi 0, %s70
      %s73 = sphi 0, %s72
      %s87 = sphi 0, %s73
      %s91 = sphi 0, %s91
      %s93 = sphi 0, %s91
      %s94 = sphi 0, %s93
      %s108 = sphi 0, %s94
      %s112 = sphi 0, %s112
      %s114 = sphi 0, %s112
      %s115 = sphi 0, %s114
      %s129 = sphi 0, %s115
      %s135 = sphi 0, %s137
      %s138 = sphi 0, %s135
      %s139 = sphi 0, %s138
      %s155 = sphi 0, %s139
    $region4: #{tpu_custom_call.1} parent=1 // loop_header_branch
      %18 = sbr.rel (%p16) target = $region8
    $region5: #{tpu_custom_call.1} parent=1 // loop_body
      %s20 = ssub.s32 %s15, 1
      %s21 = ssub.s32 %s15, 2
      %s22 = sadd.s32 %s15, 1
      %s23 = ssub.s32 %s15, %s22
      %p24 = scmp.eq.s32.totalorder %s23, 0
      %s26 = sadd.s32 %s25, 1
      %s27 = scalar_select %p24, %s25, %s26
      %p30 = pneg %p24
      %p31 = scmp.eq.s32.totalorder %s15, 1
      %p32 = por %p30, %p31
      %p33 = scmp.ne.s32.totalorder %s25, %s28
      %p34 = scmp.eq.s32.totalorder %s15, 0
      %p35 = por %p33, %p34
      %p36 = scmp.ne.s32.totalorder %s25, %s28
      %p37 = scmp.eq.s32.totalorder %s20, 1
      %p38 = por %p36, %p37
      %p39 = scmp.ne.s32.totalorder %s28, %s29
      %p40 = scmp.eq.s32.totalorder %s20, 0
      %p41 = por %p39, %p40
      %p42 = scmp.ne.s32.totalorder %s28, %s29
      %p43 = scmp.eq.s32.totalorder %s21, 1
      %p44 = por %p42, %p43
      %p46 = scmp.ne.s32.totalorder %s29, %s45
      %p47 = scmp.eq.s32.totalorder %s21, 0
      %p48 = por %p46, %p47
      %s50 = sadd.s32 %s49, 1
      %p53 = scmp.eq.s32.totalorder %s15, 1
      %p54 = scmp.ne.s32.totalorder %s49, %s51
      %p55 = scmp.eq.s32.totalorder %s15, 0
      %p56 = por %p54, %p55
      %p57 = scmp.ne.s32.totalorder %s49, %s51
      %p58 = scmp.eq.s32.totalorder %s20, 1
      %p59 = por %p57, %p58
      %p60 = scmp.ne.s32.totalorder %s51, %s52
      %p61 = scmp.eq.s32.totalorder %s20, 0
      %p62 = por %p60, %p61
      %p63 = scmp.ne.s32.totalorder %s51, %s52
      %p64 = scmp.eq.s32.totalorder %s21, 1
      %p65 = por %p63, %p64
      %p67 = scmp.ne.s32.totalorder %s52, %s66
      %p68 = scmp.eq.s32.totalorder %s21, 0
      %p69 = por %p67, %p68
      %s71 = sadd.s32 %s70, 1
      %p74 = scmp.eq.s32.totalorder %s15, 1
      %p75 = scmp.ne.s32.totalorder %s70, %s72
      %p76 = scmp.eq.s32.totalorder %s15, 0
      %p77 = por %p75, %p76
      %p78 = scmp.ne.s32.totalorder %s70, %s72
      %p79 = scmp.eq.s32.totalorder %s20, 1
      %p80 = por %p78, %p79
      %p81 = scmp.ne.s32.totalorder %s72, %s73
      %p82 = scmp.eq.s32.totalorder %s20, 0
      %p83 = por %p81, %p82
      %p84 = scmp.ne.s32.totalorder %s72, %s73
      %p85 = scmp.eq.s32.totalorder %s21, 1
      %p86 = por %p84, %p85
      %p88 = scmp.ne.s32.totalorder %s73, %s87
      %p89 = scmp.eq.s32.totalorder %s21, 0
      %p90 = por %p88, %p89
      %s92 = sadd.s32 %s91, 1
      %p95 = scmp.eq.s32.totalorder %s15, 1
      %p96 = scmp.ne.s32.totalorder %s91, %s93
      %p97 = scmp.eq.s32.totalorder %s15, 0
      %p98 = por %p96, %p97
      %p99 = scmp.ne.s32.totalorder %s91, %s93
      %p100 = scmp.eq.s32.totalorder %s20, 1
      %p101 = por %p99, %p100
      %p102 = scmp.ne.s32.totalorder %s93, %s94
      %p103 = scmp.eq.s32.totalorder %s20, 0
      %p104 = por %p102, %p103
      %p105 = scmp.ne.s32.totalorder %s93, %s94
      %p106 = scmp.eq.s32.totalorder %s21, 1
      %p107 = por %p105, %p106
      %p109 = scmp.ne.s32.totalorder %s94, %s108
      %p110 = scmp.eq.s32.totalorder %s21, 0
      %p111 = por %p109, %p110
      %s113 = sadd.s32 %s112, 1
      %p116 = scmp.eq.s32.totalorder %s15, 1
      %p117 = scmp.ne.s32.totalorder %s112, %s114
      %p118 = scmp.eq.s32.totalorder %s15, 0
      %p119 = por %p117, %p118
      %p120 = scmp.ne.s32.totalorder %s112, %s114
      %p121 = scmp.eq.s32.totalorder %s20, 1
      %p122 = por %p120, %p121
      %p123 = scmp.ne.s32.totalorder %s114, %s115
      %p124 = scmp.eq.s32.totalorder %s20, 0
      %p125 = por %p123, %p124
      %p126 = scmp.ne.s32.totalorder %s114, %s115
      %p127 = scmp.eq.s32.totalorder %s21, 1
      %p128 = por %p126, %p127
      %p130 = scmp.ne.s32.totalorder %s115, %s129
      %p131 = scmp.eq.s32.totalorder %s21, 0
      %p132 = por %p130, %p131
      %s133 = ssub.s32 %s15, %s22
      %p134 = scmp.eq.s32.totalorder %s133, 0
      %s136 = sadd.s32 %s135, 1
      %s137 = scalar_select %p134, %s135, %s136
      %p140 = pneg %p134
      %p141 = scmp.eq.s32.totalorder %s15, 1
      %p142 = por %p140, %p141
      %p143 = scmp.ne.s32.totalorder %s135, %s138
      %p144 = scmp.eq.s32.totalorder %s15, 0
      %p145 = por %p143, %p144
      %p146 = scmp.ne.s32.totalorder %s135, %s138
      %p147 = scmp.eq.s32.totalorder %s20, 1
      %p148 = por %p146, %p147
      %p149 = scmp.ne.s32.totalorder %s138, %s139
      %p150 = scmp.eq.s32.totalorder %s20, 0
      %p151 = por %p149, %p150
      %p152 = scmp.ne.s32.totalorder %s138, %s139
      %p153 = scmp.eq.s32.totalorder %s21, 1
      %p154 = por %p152, %p153
      %p156 = scmp.ne.s32.totalorder %s139, %s155
      %p157 = scmp.eq.s32.totalorder %s21, 0
      %p158 = por %p156, %p157
      %p159 = scmp.le.s32.totalorder 1, %s15
      %p160 = scmp.lt.s32.totalorder %s15, 3
      %p161 = pnand %p159, %p160
      %p162 = pneg %p161
      // Predicated region
      $region9: #{tpu_custom_call.1} parent=5 // pred_check
        _
      $region10: #{tpu_custom_call.1} parent=5 // pred_check_branch
        %164 = sbr.rel (%p161) target = $region12
      $region11: #{tpu_custom_call.1} parent=5 // pred_region
        %s165 = ssub.s32 %s15, 1
        // Predicated region
        $region13: #{tpu_custom_call.1} parent=11 // pred_check
          %p166 = pneg %p62
        $region14: #{tpu_custom_call.1} parent=11 // pred_check_branch
          %168 = sbr.rel (%p166) target = $region16
        $region15: #{tpu_custom_call.1} parent=11 // pred_region
          _
        $region16: #{tpu_custom_call.1} parent=11 // pred_fallthru
          _
        // Predicated region
        $region17: #{tpu_custom_call.1} parent=11 // pred_check
          %p169 = pneg %p83
        $region18: #{tpu_custom_call.1} parent=11 // pred_check_branch
          %171 = sbr.rel (%p169) target = $region20
        $region19: #{tpu_custom_call.1} parent=11 // pred_region
          _
        $region20: #{tpu_custom_call.1} parent=11 // pred_fallthru
          _
        // Predicated region
        $region21: #{tpu_custom_call.1} parent=11 // pred_check
          %p172 = pneg %p104
        $region22: #{tpu_custom_call.1} parent=11 // pred_check_branch
          %174 = sbr.rel (%p172) target = $region24
        $region23: #{tpu_custom_call.1} parent=11 // pred_region
          _
        $region24: #{tpu_custom_call.1} parent=11 // pred_fallthru
          _
        // Predicated region
        $region25: #{tpu_custom_call.1} parent=11 // pred_check
          %p175 = pneg %p125
        $region26: #{tpu_custom_call.1} parent=11 // pred_check_branch
          %177 = sbr.rel (%p175) target = $region28
        $region27: #{tpu_custom_call.1} parent=11 // pred_region
          _
        $region28: #{tpu_custom_call.1} parent=11 // pred_fallthru
          _
      $region12: #{tpu_custom_call.1} parent=5 // pred_fallthru
        _
      %p178 = scmp.lt.s32.totalorder %s15, 2
      // Predicated region
      $region29: #{tpu_custom_call.1} parent=5 // pred_check
        %p179 = pneg %p178
      $region30: #{tpu_custom_call.1} parent=5 // pred_check_branch
        %181 = sbr.rel (%p179) target = $region32
      $region31: #{tpu_custom_call.1} parent=5 // pred_region
        // Predicated region
        $region33: #{tpu_custom_call.1} parent=31 // pred_check
          %p182 = pneg %p35
        $region34: #{tpu_custom_call.1} parent=31 // pred_check_branch
          %184 = sbr.rel (%p182) target = $region36
        $region35: #{tpu_custom_call.1} parent=31 // pred_region
          %s185 = sand.u32 %s25, 1
          %s186 = sand.u32 %s25, 1
          %s187 = smul.addr %s186, 64
          %s188 = scalar_lea.vmem [#allocation3], %s187
          %s189 = smul.u32 4, %s15
          %s190 = smul.addr %s189, 8
          %s191 = scalar_lea.vmem %s0, %s190
          // Predicated region
          $region37: #{tpu_custom_call.1} parent=35 // pred_check
            _
          $region38: #{tpu_custom_call.1} parent=35 // pred_check_branch
            %193 = sbr.rel (0) target = $region40
          $region39: #{tpu_custom_call.1} parent=35 // pred_region
            // Predicated region
            $region41: #{tpu_custom_call.1} parent=39 // pred_check
              _
            $region42: #{tpu_custom_call.1} parent=39 // pred_check_branch
              %195 = sbr.rel (0) target = $region44
            $region43: #{tpu_custom_call.1} parent=39 // pred_region
              loop: start=0, step=1, limit=1
              $region45: #{tpu_custom_call.1} parent=43 // loop_pre_header
                _
              $region46: #{tpu_custom_call.1} parent=43 // loop_header
                %s197 = sphi 0, %s201
                %p198 = scmp.ge.s32.totalorder %s197, 1
                %s202 = sphi %s191, %s191
                %s203 = sphi %s188, %s188
              $region47: #{tpu_custom_call.1} parent=43 // loop_header_branch
                %200 = sbr.rel (%p198) target = $region51
              $region48: #{tpu_custom_call.1} parent=43 // loop_body
                %v204 = vld [vmem:[%s202] sm:$0xff]
                %205 = vst [vmem:[%s203] sm:$0xff] %v204
                %v206 = vld [vmem:[%s202 + $0x8] sm:$0xff]
                %207 = vst [vmem:[%s203 + $0x8] sm:$0xff] %v206
                %v208 = vld [vmem:[%s202 + $0x10] sm:$0xff]
                %209 = vst [vmem:[%s203 + $0x10] sm:$0xff] %v208
                %v210 = vld [vmem:[%s202 + $0x18] sm:$0xff]
                %211 = vst [vmem:[%s203 + $0x18] sm:$0xff] %v210
                %v212 = vld [vmem:[%s202 + $0x40] sm:$0xff]
                %213 = vst [vmem:[%s203 + $0x20] sm:$0xff] %v212
                %v214 = vld [vmem:[%s202 + $0x48] sm:$0xff]
                %215 = vst [vmem:[%s203 + $0x28] sm:$0xff] %v214
                %v216 = vld [vmem:[%s202 + $0x50] sm:$0xff]
                %217 = vst [vmem:[%s203 + $0x30] sm:$0xff] %v216
                %v218 = vld [vmem:[%s202 + $0x58] sm:$0xff]
                %219 = vst [vmem:[%s203 + $0x38] sm:$0xff] %v218
              $region49: #{tpu_custom_call.1} parent=43 // loop_footer
                %s201 = sadd.s32 1, %s197
              $region50: #{tpu_custom_call.1} parent=43 // loop_footer_branch
                %196 = sbr.rel target = $region46
              $region51: #{tpu_custom_call.1} parent=43 // loop_exit
                _
            $region44: #{tpu_custom_call.1} parent=39 // pred_fallthru
              _
            // Predicated region
            $region52: #{tpu_custom_call.1} parent=39 // pred_check
              _
            $region53: #{tpu_custom_call.1} parent=39 // pred_check_branch
              %221 = sbr.rel target = $region55
            $region54: #{tpu_custom_call.1} parent=39 // pred_region
              _
            $region55: #{tpu_custom_call.1} parent=39 // pred_fallthru
              _
          $region40: #{tpu_custom_call.1} parent=35 // pred_fallthru
            _
          %222 = vnop
        $region36: #{tpu_custom_call.1} parent=31 // pred_fallthru
          _
      $region32: #{tpu_custom_call.1} parent=5 // pred_fallthru
        _
      %p223 = scmp.le.s32.totalorder 1, %s15
      %p224 = scmp.lt.s32.totalorder %s15, 3
      %p225 = pnand %p223, %p224
      %p226 = pneg %p225
      // Predicated region
      $region56: #{tpu_custom_call.1} parent=5 // pred_check
        _
      $region57: #{tpu_custom_call.1} parent=5 // pred_check_branch
        %228 = sbr.rel (%p225) target = $region59
      $region58: #{tpu_custom_call.1} parent=5 // pred_region
        %s229 = ssub.s32 %s15, 1
        %s230 = sand.u32 %s28, 1
        %s231 = sand.u32 %s28, 1
        %s232 = smul.addr %s231, 64
        %s233 = scalar_lea.vmem [#allocation3], %s232
        // Predicated region
        $region60: #{tpu_custom_call.1} parent=58 // pred_check
          %p234 = pneg %p41
        $region61: #{tpu_custom_call.1} parent=58 // pred_check_branch
          %236 = sbr.rel (%p234) target = $region63
        $region62: #{tpu_custom_call.1} parent=58 // pred_region
          _
        $region63: #{tpu_custom_call.1} parent=58 // pred_fallthru
          _
        %s237 = sand.u32 %s28, 1
        %s238 = sand.u32 %s28, 1
        %s239 = smul.addr %s238, 64
        %s240 = scalar_lea.vmem [#allocation3], %s239
        %p241 = pneg %p41
        %p242 = pneg %p38
        %p243 = pneg %p62
        %p244 = pneg %p59
        %p245 = pneg %p83
        %p246 = pneg %p80
        %p247 = pneg %p104
        %p248 = pneg %p101
        %p249 = pneg %p125
        %p250 = pneg %p122
        %p251 = pneg %p151
        %p252 = pneg %p148
        %s253 = sand.u32 %s138, 1
        %s254 = scalar_lea.sflag [#allocation5], %s253
        %s255 = sand.u32 %s138, 1
        %s256 = smul.addr %s255, 4
        %s257 = scalar_lea.vmem [#allocation4], %s256
        %s258 = smul.u32 4, %s20
        %s259 = smul.u32 4, %s20
        %v260 = vld [vmem:[%s1] sm:$0xff]
        %v261 = vld [vmem:[%s1 + $0x8] sm:$0xff]
        %v262 = vld [vmem:[%s1 + $0x10] sm:$0xff]
        %v263 = vld [vmem:[%s1 + $0x18] sm:$0xff]
        %v264 = vld [vmem:[%s1 + $0x20] sm:$0xff]
        %v265 = vld [vmem:[%s1 + $0x28] sm:$0xff]
        %v266 = vld [vmem:[%s1 + $0x30] sm:$0xff]
        %v267 = vld [vmem:[%s1 + $0x38] sm:$0xff]
        %v268 = vld [vmem:[%s233] sm:$0xff]
        %v269 = vld [vmem:[%s233 + $0x8] sm:$0xff]
        %v270 = vld [vmem:[%s233 + $0x10] sm:$0xff]
        %v271 = vld [vmem:[%s233 + $0x18] sm:$0xff]
        %v272 = vld [vmem:[%s233 + $0x20] sm:$0x3f]
        %v273 = vld [vmem:[%s233 + $0x28] sm:$0x3f]
        %v274 = vld [vmem:[%s233 + $0x30] sm:$0x3f]
        %v275 = vld [vmem:[%s233 + $0x38] sm:$0x3f]
        %v276 = vld [vmem:[%s2] sm:$0xff]
        %v277 = vld [vmem:[%s2 + $0x8] sm:$0xff]
        %v278 = vld [vmem:[%s2 + $0x10] sm:$0xff]
        %v279 = vld [vmem:[%s2 + $0x18] sm:$0xff]
        %v280 = vld [vmem:[%s2 + $0x20] sm:$0xff]
        %v281 = vld [vmem:[%s2 + $0x28] sm:$0xff]
        %v282 = vld [vmem:[%s2 + $0x30] sm:$0xff]
        %v283 = vld [vmem:[%s2 + $0x38] sm:$0xff]
        %285 = vset.pattern.permute.xlu0 0
        %286 = vperm.xlu0 %285, %v276
        %v287 = vpop.permute.xlu0 %286
        %290 = vset.pattern.permute.xlu0 0
        %291 = vperm.xlu0 %290, %v277
        %v292 = vpop.permute.xlu0 %291
        %295 = vset.pattern.permute.xlu0 0
        %296 = vperm.xlu0 %295, %v278
        %v297 = vpop.permute.xlu0 %296
        %300 = vset.pattern.permute.xlu0 0
        %301 = vperm.xlu0 %300, %v279
        %v302 = vpop.permute.xlu0 %301
        %305 = vset.pattern.permute.xlu0 0
        %306 = vperm.xlu0 %305, %v280
        %v307 = vpop.permute.xlu0 %306
        %310 = vset.pattern.permute.xlu0 0
        %311 = vperm.xlu0 %310, %v281
        %v312 = vpop.permute.xlu0 %311
        %315 = vset.pattern.permute.xlu0 0
        %316 = vperm.xlu0 %315, %v282
        %v317 = vpop.permute.xlu0 %316
        %320 = vset.pattern.permute.xlu0 0
        %321 = vperm.xlu0 %320, %v283
        %v322 = vpop.permute.xlu0 %321
        %vm324 = vcmask 113664
        %v326 = vsel %vm324, %v260, 0
        %v329 = vsel %vm324, %v261, 0
        %v332 = vsel %vm324, %v262, 0
        %v335 = vsel %vm324, %v263, 0
        %v338 = vsel %vm324, %v264, 0
        %v341 = vsel %vm324, %v265, 0
        %v344 = vsel %vm324, %v266, 0
        %v347 = vsel %vm324, %v267, 0
        %vm349 = vcmask 1045504
        %v351 = vsel %vm349, %v272, 0
        %v354 = vsel %vm349, %v273, 0
        %v357 = vsel %vm349, %v274, 0
        %v360 = vsel %vm349, %v275, 0
        %362 = vmatprep.subr.mxu0 0.0
        %363 = vmatpush1.msra.mxu0 0.0
        %364 = vmatprep.subr.mxu0 0.0
        %365 = vmatpush1.msra.mxu0 0.0
        %366 = vmatprep.subr.mxu0 0.0
        %367 = vmatpush1.msra.mxu0 0.0
        %368 = vmatprep.subr.mxu0 0.0
        %369 = vmatpush1.msra.mxu0 0.0
        %370 = vmatprep.subr.mxu0 0.0
        %371 = vmatpush1.msra.mxu0 0.0
        %372 = vmatprep.subr.mxu0 0.0
        %373 = vmatpush1.msra.mxu0 0.0
        %374 = vmatprep.subr.mxu0 0.0
        %375 = vmatpush1.msra.mxu0 0.0
        %376 = vmatprep.subr.mxu0 0.0
        %377 = vmatpush1.msra.mxu0 0.0
        %378 = vmatprep.subr.mxu0 0.0
        %379 = vmatpush1.msra.mxu0 0.0
        %380 = vmatprep.subr.mxu0 0.0
        %381 = vmatpush1.msra.mxu0 0.0
        %382 = vmatprep.subr.mxu0 0.0
        %383 = vmatpush1.msra.mxu0 0.0
        %384 = vmatprep.subr.mxu0 0.0
        %385 = vmatpush1.msra.mxu0 0.0
        %386 = vmatprep.subr.mxu0 0.0
        %387 = vmatpush1.msra.mxu0 0.0
        %388 = vmatprep.subr.mxu0 0.0
        %389 = vmatpush1.msra.mxu0 0.0
        %390 = vmatprep.subr.mxu0 %v354
        %391 = vmatpush1.msra.mxu0 %v351
        %392 = vmatprep.subr.mxu0 %v269
        %393 = vmatpush1.msra.mxu0 %v268
        %394 = vmatprep.subr.mxu0 0.0
        %395 = vmatpush2.msra.mxu0 0.0
        %396 = vmatprep.subr.mxu0 0.0
        %397 = vmatpush2.msra.mxu0 0.0
        %398 = vmatprep.subr.mxu0 0.0
        %399 = vmatpush2.msra.mxu0 0.0
        %400 = vmatprep.subr.mxu0 0.0
        %401 = vmatpush2.msra.mxu0 0.0
        %402 = vmatprep.subr.mxu0 0.0
        %403 = vmatpush2.msra.mxu0 0.0
        %404 = vmatprep.subr.mxu0 0.0
        %405 = vmatpush2.msra.mxu0 0.0
        %406 = vmatprep.subr.mxu0 0.0
        %407 = vmatpush2.msra.mxu0 0.0
        %408 = vmatprep.subr.mxu0 0.0
        %409 = vmatpush2.msra.mxu0 0.0
        %410 = vmatprep.subr.mxu0 0.0
        %411 = vmatpush2.msra.mxu0 0.0
        %412 = vmatprep.subr.mxu0 0.0
        %413 = vmatpush2.msra.mxu0 0.0
        %414 = vmatprep.subr.mxu0 0.0
        %415 = vmatpush2.msra.mxu0 0.0
        %416 = vmatprep.subr.mxu0 0.0
        %417 = vmatpush2.msra.mxu0 0.0
        %418 = vmatprep.subr.mxu0 0.0
        %419 = vmatpush2.msra.mxu0 0.0
        %420 = vmatprep.subr.mxu0 0.0
        %421 = vmatpush2.msra.mxu0 0.0
        %422 = vmatprep.subr.mxu0 0.0
        %423 = vmatpush2.msra.mxu0 0.0
        %424 = vmatprep.subr.mxu0 0.0
        %425 = vmatpush2.msra.mxu0 0.0
        %426 = vmatprep.mubr.f32.mxu0 0.0
        %427 = vmatmul.mubr.f32.gmra.mxu0 %v326
        %v428 = vpop.f32.mrf.mxu0
        %v429 = vadd.f32 %v287, %v428
        %v430 = vpop.f32.mrf.mxu0
        %v431 = vadd.f32 %v287, %v430
        %432 = vmatprep.mubr.f32.mxu0 0.0
        %433 = vmatmul.mubr.f32.gmra.mxu0 %v329
        %v434 = vpop.f32.mrf.mxu0
        %v435 = vadd.f32 %v292, %v434
        %v436 = vpop.f32.mrf.mxu0
        %v437 = vadd.f32 %v292, %v436
        %438 = vmatprep.mubr.f32.mxu0 0.0
        %439 = vmatmul.mubr.f32.gmra.mxu0 %v332
        %v440 = vpop.f32.mrf.mxu0
        %v441 = vadd.f32 %v297, %v440
        %v442 = vpop.f32.mrf.mxu0
        %v443 = vadd.f32 %v297, %v442
        %444 = vmatprep.mubr.f32.mxu0 0.0
        %445 = vmatmul.mubr.f32.gmra.mxu0 %v335
        %v446 = vpop.f32.mrf.mxu0
        %v447 = vadd.f32 %v302, %v446
        %v448 = vpop.f32.mrf.mxu0
        %v449 = vadd.f32 %v302, %v448
        %450 = vmatprep.mubr.f32.mxu0 0.0
        %451 = vmatmul.mubr.f32.gmra.mxu0 %v338
        %v452 = vpop.f32.mrf.mxu0
        %v453 = vadd.f32 %v307, %v452
        %v454 = vpop.f32.mrf.mxu0
        %v455 = vadd.f32 %v307, %v454
        %456 = vmatprep.mubr.f32.mxu0 0.0
        %457 = vmatmul.mubr.f32.gmra.mxu0 %v341
        %v458 = vpop.f32.mrf.mxu0
        %v459 = vadd.f32 %v312, %v458
        %v460 = vpop.f32.mrf.mxu0
        %v461 = vadd.f32 %v312, %v460
        %462 = vmatprep.mubr.f32.mxu0 0.0
        %463 = vmatmul.mubr.f32.gmra.mxu0 %v344
        %v464 = vpop.f32.mrf.mxu0
        %v465 = vadd.f32 %v317, %v464
        %v466 = vpop.f32.mrf.mxu0
        %v467 = vadd.f32 %v317, %v466
        %468 = vmatprep.mubr.f32.mxu0 0.0
        %469 = vmatmul.mubr.f32.gmra.mxu0 %v347
        %v470 = vpop.f32.mrf.mxu0
        %v471 = vadd.f32 %v322, %v470
        %v472 = vpop.f32.mrf.mxu0
        %v473 = vadd.f32 %v322, %v472
        %474 = vdwg.mxu0
        %475 = vmatprep.subr.mxu0 0.0
        %476 = vmatpush1.msra.mxu0 0.0
        %477 = vmatprep.subr.mxu0 0.0
        %478 = vmatpush1.msra.mxu0 0.0
        %479 = vmatprep.subr.mxu0 0.0
        %480 = vmatpush1.msra.mxu0 0.0
        %481 = vmatprep.subr.mxu0 0.0
        %482 = vmatpush1.msra.mxu0 0.0
        %483 = vmatprep.subr.mxu0 0.0
        %484 = vmatpush1.msra.mxu0 0.0
        %485 = vmatprep.subr.mxu0 0.0
        %486 = vmatpush1.msra.mxu0 0.0
        %487 = vmatprep.subr.mxu0 0.0
        %488 = vmatpush1.msra.mxu0 0.0
        %489 = vmatprep.subr.mxu0 0.0
        %490 = vmatpush1.msra.mxu0 0.0
        %491 = vmatprep.subr.mxu0 0.0
        %492 = vmatpush1.msra.mxu0 0.0
        %493 = vmatprep.subr.mxu0 0.0
        %494 = vmatpush1.msra.mxu0 0.0
        %495 = vmatprep.subr.mxu0 0.0
        %496 = vmatpush1.msra.mxu0 0.0
        %497 = vmatprep.subr.mxu0 0.0
        %498 = vmatpush1.msra.mxu0 0.0
        %499 = vmatprep.subr.mxu0 0.0
        %500 = vmatpush1.msra.mxu0 0.0
        %501 = vmatprep.subr.mxu0 0.0
        %502 = vmatpush1.msra.mxu0 0.0
        %503 = vmatprep.subr.mxu0 %v360
        %504 = vmatpush1.msra.mxu0 %v357
        %505 = vmatprep.subr.mxu0 %v271
        %506 = vmatpush1.msra.mxu0 %v270
        %507 = vmatprep.subr.mxu0 0.0
        %508 = vmatpush2.msra.mxu0 0.0
        %509 = vmatprep.subr.mxu0 0.0
        %510 = vmatpush2.msra.mxu0 0.0
        %511 = vmatprep.subr.mxu0 0.0
        %512 = vmatpush2.msra.mxu0 0.0
        %513 = vmatprep.subr.mxu0 0.0
        %514 = vmatpush2.msra.mxu0 0.0
        %515 = vmatprep.subr.mxu0 0.0
        %516 = vmatpush2.msra.mxu0 0.0
        %517 = vmatprep.subr.mxu0 0.0
        %518 = vmatpush2.msra.mxu0 0.0
        %519 = vmatprep.subr.mxu0 0.0
        %520 = vmatpush2.msra.mxu0 0.0
        %521 = vmatprep.subr.mxu0 0.0
        %522 = vmatpush2.msra.mxu0 0.0
        %523 = vmatprep.subr.mxu0 0.0
        %524 = vmatpush2.msra.mxu0 0.0
        %525 = vmatprep.subr.mxu0 0.0
        %526 = vmatpush2.msra.mxu0 0.0
        %527 = vmatprep.subr.mxu0 0.0
        %528 = vmatpush2.msra.mxu0 0.0
        %529 = vmatprep.subr.mxu0 0.0
        %530 = vmatpush2.msra.mxu0 0.0
        %531 = vmatprep.subr.mxu0 0.0
        %532 = vmatpush2.msra.mxu0 0.0
        %533 = vmatprep.subr.mxu0 0.0
        %534 = vmatpush2.msra.mxu0 0.0
        %535 = vmatprep.subr.mxu0 0.0
        %536 = vmatpush2.msra.mxu0 0.0
        %537 = vmatprep.subr.mxu0 0.0
        %538 = vmatpush2.msra.mxu0 0.0
        %539 = vmatprep.mubr.f32.mxu0 0.0
        %540 = vmatmul.mubr.f32.gmra.mxu0 %v326
        %v541 = vpop.f32.mrf.mxu0
        %v542 = vadd.f32 %v287, %v541
        %v543 = vpop.f32.mrf.mxu0
        %v544 = vadd.f32 %v287, %v543
        %545 = vmatprep.mubr.f32.mxu0 0.0
        %546 = vmatmul.mubr.f32.gmra.mxu0 %v329
        %v547 = vpop.f32.mrf.mxu0
        %v548 = vadd.f32 %v292, %v547
        %v549 = vpop.f32.mrf.mxu0
        %v550 = vadd.f32 %v292, %v549
        %551 = vmatprep.mubr.f32.mxu0 0.0
        %552 = vmatmul.mubr.f32.gmra.mxu0 %v332
        %v553 = vpop.f32.mrf.mxu0
        %v554 = vadd.f32 %v297, %v553
        %v555 = vpop.f32.mrf.mxu0
        %v556 = vadd.f32 %v297, %v555
        %557 = vmatprep.mubr.f32.mxu0 0.0
        %558 = vmatmul.mubr.f32.gmra.mxu0 %v335
        %v559 = vpop.f32.mrf.mxu0
        %v560 = vadd.f32 %v302, %v559
        %v561 = vpop.f32.mrf.mxu0
        %v562 = vadd.f32 %v302, %v561
        %563 = vmatprep.mubr.f32.mxu0 0.0
        %564 = vmatmul.mubr.f32.gmra.mxu0 %v338
        %v565 = vpop.f32.mrf.mxu0
        %v566 = vadd.f32 %v307, %v565
        %v567 = vpop.f32.mrf.mxu0
        %v568 = vadd.f32 %v307, %v567
        %569 = vmatprep.mubr.f32.mxu0 0.0
        %570 = vmatmul.mubr.f32.gmra.mxu0 %v341
        %v571 = vpop.f32.mrf.mxu0
        %v572 = vadd.f32 %v312, %v571
        %v573 = vpop.f32.mrf.mxu0
        %v574 = vadd.f32 %v312, %v573
        %575 = vmatprep.mubr.f32.mxu0 0.0
        %576 = vmatmul.mubr.f32.gmra.mxu0 %v344
        %v577 = vpop.f32.mrf.mxu0
        %v578 = vadd.f32 %v317, %v577
        %v579 = vpop.f32.mrf.mxu0
        %v580 = vadd.f32 %v317, %v579
        %581 = vmatprep.mubr.f32.mxu0 0.0
        %582 = vmatmul.mubr.f32.gmra.mxu0 %v347
        %v583 = vpop.f32.mrf.mxu0
        %v584 = vadd.f32 %v322, %v583
        %v585 = vpop.f32.mrf.mxu0
        %v586 = vadd.f32 %v322, %v585
        %587 = vdwg.mxu0
        %v588 = vmax.f32 %v429, 0.0
        %v589 = vmax.f32 %v431, 0.0
        %v590 = vmax.f32 %v542, 0.0
        %v591 = vmax.f32 %v544, 0.0
        %v592 = vmax.f32 %v435, 0.0
        %v593 = vmax.f32 %v437, 0.0
        %v594 = vmax.f32 %v548, 0.0
        %v595 = vmax.f32 %v550, 0.0
        %v596 = vmax.f32 %v441, 0.0
        %v597 = vmax.f32 %v443, 0.0
        %v598 = vmax.f32 %v554, 0.0
        %v599 = vmax.f32 %v556, 0.0
        %v600 = vmax.f32 %v447, 0.0
        %v601 = vmax.f32 %v449, 0.0
        %v602 = vmax.f32 %v560, 0.0
        %v603 = vmax.f32 %v562, 0.0
        %v604 = vmax.f32 %v453, 0.0
        %v605 = vmax.f32 %v455, 0.0
        %v606 = vmax.f32 %v566, 0.0
        %v607 = vmax.f32 %v568, 0.0
        %v608 = vmax.f32 %v459, 0.0
        %v609 = vmax.f32 %v461, 0.0
        %v610 = vmax.f32 %v572, 0.0
        %v611 = vmax.f32 %v574, 0.0
        %v612 = vmax.f32 %v465, 0.0
        %v613 = vmax.f32 %v467, 0.0
        %v614 = vmax.f32 %v578, 0.0
        %v615 = vmax.f32 %v580, 0.0
        %v616 = vmax.f32 %v471, 0.0
        %v617 = vmax.f32 %v473, 0.0
        %v618 = vmax.f32 %v584, 0.0
        %v619 = vmax.f32 %v586, 0.0
        %v620 = vld [vmem:[%s3] sm:$0xff]
        %v621 = vld [vmem:[%s3 + $0x8] sm:$0xff]
        %v622 = vld [vmem:[%s3 + $0x10] sm:$0xff]
        %v623 = vld [vmem:[%s3 + $0x18] sm:$0xff]
        %v624 = vld [vmem:[%s3 + $0x20] sm:$0xff]
        %v625 = vld [vmem:[%s3 + $0x28] sm:$0xff]
        %v626 = vld [vmem:[%s3 + $0x30] sm:$0xff]
        %v627 = vld [vmem:[%s3 + $0x38] sm:$0xff]
        %629 = vset.pattern.permute.xlu0 0
        %630 = vperm.xlu0 %629, %v620
        %v631 = vpop.permute.xlu0 %630
        %634 = vset.pattern.permute.xlu0 0
        %635 = vperm.xlu0 %634, %v621
        %v636 = vpop.permute.xlu0 %635
        %639 = vset.pattern.permute.xlu0 0
        %640 = vperm.xlu0 %639, %v622
        %v641 = vpop.permute.xlu0 %640
        %644 = vset.pattern.permute.xlu0 0
        %645 = vperm.xlu0 %644, %v623
        %v646 = vpop.permute.xlu0 %645
        %649 = vset.pattern.permute.xlu0 0
        %650 = vperm.xlu0 %649, %v624
        %v651 = vpop.permute.xlu0 %650
        %654 = vset.pattern.permute.xlu0 0
        %655 = vperm.xlu0 %654, %v625
        %v656 = vpop.permute.xlu0 %655
        %659 = vset.pattern.permute.xlu0 0
        %660 = vperm.xlu0 %659, %v626
        %v661 = vpop.permute.xlu0 %660
        %664 = vset.pattern.permute.xlu0 0
        %665 = vperm.xlu0 %664, %v627
        %v666 = vpop.permute.xlu0 %665
        %v668 = vmul.f32 %v588, %v631
        %v669 = vmul.f32 %v589, %v631
        %v670 = vmul.f32 %v590, %v631
        %v671 = vmul.f32 %v591, %v631
        %v672 = vmul.f32 %v592, %v636
        %v673 = vmul.f32 %v593, %v636
        %v674 = vmul.f32 %v594, %v636
        %v675 = vmul.f32 %v595, %v636
        %v676 = vmul.f32 %v596, %v641
        %v677 = vmul.f32 %v597, %v641
        %v678 = vmul.f32 %v598, %v641
        %v679 = vmul.f32 %v599, %v641
        %v680 = vmul.f32 %v600, %v646
        %v681 = vmul.f32 %v601, %v646
        %v682 = vmul.f32 %v602, %v646
        %v683 = vmul.f32 %v603, %v646
        %v684 = vmul.f32 %v604, %v651
        %v685 = vmul.f32 %v605, %v651
        %v686 = vmul.f32 %v606, %v651
        %v687 = vmul.f32 %v607, %v651
        %v688 = vmul.f32 %v608, %v656
        %v689 = vmul.f32 %v609, %v656
        %v690 = vmul.f32 %v610, %v656
        %v691 = vmul.f32 %v611, %v656
        %v692 = vmul.f32 %v612, %v661
        %v693 = vmul.f32 %v613, %v661
        %v694 = vmul.f32 %v614, %v661
        %v695 = vmul.f32 %v615, %v661
        %v696 = vmul.f32 %v616, %v666
        %v697 = vmul.f32 %v617, %v666
        %v698 = vmul.f32 %v618, %v666
        %v699 = vmul.f32 %v619, %v666
        %v700 = vadd.f32 %v668, %v672
        %v701 = vadd.f32 %v700, %v676
        %v702 = vadd.f32 %v701, %v680
        %v703 = vadd.f32 %v702, %v684
        %v704 = vadd.f32 %v703, %v688
        %v705 = vadd.f32 %v704, %v692
        %v706 = vadd.f32 %v705, %v696
        %v707 = vrot.slane %v706, 4
        %v708 = vadd.f32 %v706, %v707
        %v709 = vrot.slane %v708, 2
        %v710 = vadd.f32 %v708, %v709
        %v711 = vrot.slane %v710, 1
        %v712 = vadd.f32 %v710, %v711
        %v713 = vadd.f32 %v669, %v673
        %v714 = vadd.f32 %v713, %v677
        %v715 = vadd.f32 %v714, %v681
        %v716 = vadd.f32 %v715, %v685
        %v717 = vadd.f32 %v716, %v689
        %v718 = vadd.f32 %v717, %v693
        %v719 = vadd.f32 %v718, %v697
        %v720 = vrot.slane %v719, 4
        %v721 = vadd.f32 %v719, %v720
        %v722 = vrot.slane %v721, 2
        %v723 = vadd.f32 %v721, %v722
        %v724 = vrot.slane %v723, 1
        %v725 = vadd.f32 %v723, %v724
        %v726 = vadd.f32 %v670, %v674
        %v727 = vadd.f32 %v726, %v678
        %v728 = vadd.f32 %v727, %v682
        %v729 = vadd.f32 %v728, %v686
        %v730 = vadd.f32 %v729, %v690
        %v731 = vadd.f32 %v730, %v694
        %v732 = vadd.f32 %v731, %v698
        %v733 = vrot.slane %v732, 4
        %v734 = vadd.f32 %v732, %v733
        %v735 = vrot.slane %v734, 2
        %v736 = vadd.f32 %v734, %v735
        %v737 = vrot.slane %v736, 1
        %v738 = vadd.f32 %v736, %v737
        %v739 = vadd.f32 %v671, %v675
        %v740 = vadd.f32 %v739, %v679
        %v741 = vadd.f32 %v740, %v683
        %v742 = vadd.f32 %v741, %v687
        %v743 = vadd.f32 %v742, %v691
        %v744 = vadd.f32 %v743, %v695
        %v745 = vadd.f32 %v744, %v699
        %v746 = vrot.slane %v745, 4
        %v747 = vadd.f32 %v745, %v746
        %v748 = vrot.slane %v747, 2
        %v749 = vadd.f32 %v747, %v748
        %v750 = vrot.slane %v749, 1
        %v751 = vadd.f32 %v749, %v750
        %s752 = sld [smem:[#allocation2]]
        %v753 = vstv %s752
        %v754 = vadd.f32 %v712, %v753
        %v755 = vadd.f32 %v725, %v753
        %v756 = vadd.f32 %v738, %v753
        %v757 = vadd.f32 %v751, %v753
        %v762 = vcombine.low %v754, %v755
        %v763 = vcombine.low %v756, %v757
        %v765 = vunpack.c.l.s4 1966171168
        %v766 = vunpack.c.0.s8 %v765
        %v767 = vlaneseq
        %v768 = vshrl.u32 %v767, 7
        %v769 = vsub.s32 %v766, %v768
        %v770 = vrot.slane %v762, %v769
        %v772 = vunpack.c.l.s4 1966171168
        %v773 = vunpack.c.0.s8 %v772
        %v774 = vlaneseq
        %v775 = vshrl.u32 %v774, 7
        %v776 = vsub.s32 %v773, %v775
        %v777 = vrot.slane %v763, %v776
        %v778 = vcombine.low %v770, %v777
        %v780 = vunpack.c.l.s4 1966171168
        %v781 = vunpack.c.0.s8 %v780
        %v782 = vlaneseq
        %v783 = vshrl.u32 %v782, 7
        %v784 = vsub.s32 %v781, %v783
        %v785 = vrot.slane %v778, %v784
        %v787 = vlaneseq
        %vm788 = vcmp.ge.s32.totalorder %v787, 0
        %vm789 = vcmp.lt.s32.totalorder %v787, 512
        %vm790 = vmand %vm788, %vm789
        %791 = vst.msk [vmem:[%s257] sm:$0xf] %vm790, %v785
        %s792 = sand.u32 %s138, 1
        %s793 = scalar_lea.sflag [#allocation5], %s792
        %s794 = sand.u32 %s138, 1
        %s795 = smul.addr %s794, 4
        %s796 = scalar_lea.vmem [#allocation4], %s795
        // Predicated region
        $region64: #{tpu_custom_call.1} parent=58 // pred_check
          %p797 = pneg %p148
        $region65: #{tpu_custom_call.1} parent=58 // pred_check_branch
          %799 = sbr.rel (%p797) target = $region67
        $region66: #{tpu_custom_call.1} parent=58 // pred_region
          %s800 = smul.u32 4, %s20
          %s802 = ssub.s32 64, 64
          %803 = vsyncadd %s793, %s802
          %s804 = smul.addr %s800, 16
          %s805 = scalar_lea.hbm %s5, %s804
          %s807 = sshll.u32 %s796, 4
          %s808 = int_to_ptr.vmem [resolvable:$true] %s807
          %810 = dma.vmem_to_hbm [thread:$0]  %s808, 64, %s805, %s793
        $region67: #{tpu_custom_call.1} parent=58 // pred_fallthru
          _
      $region59: #{tpu_custom_call.1} parent=5 // pred_fallthru
        _
      %p811 = scmp.le.s32.totalorder 2, %s15
      // Predicated region
      $region68: #{tpu_custom_call.1} parent=5 // pred_check
        %p812 = pneg %p811
      $region69: #{tpu_custom_call.1} parent=5 // pred_check_branch
        %814 = sbr.rel (%p812) target = $region71
      $region70: #{tpu_custom_call.1} parent=5 // pred_region
        %s815 = ssub.s32 %s15, 2
        // Predicated region
        $region72: #{tpu_custom_call.1} parent=70 // pred_check
          %p816 = pneg %p154
        $region73: #{tpu_custom_call.1} parent=70 // pred_check_branch
          %818 = sbr.rel (%p816) target = $region75
        $region74: #{tpu_custom_call.1} parent=70 // pred_region
          %s819 = sand.u32 %s139, 1
          %s820 = scalar_lea.sflag [#allocation5], %s819
          %s821 = sand.u32 %s139, 1
          %s822 = smul.addr %s821, 4
          %s823 = scalar_lea.vmem [#allocation4], %s822
          %824 = dma.done %s820, 64
        $region75: #{tpu_custom_call.1} parent=70 // pred_fallthru
          _
      $region71: #{tpu_custom_call.1} parent=5 // pred_fallthru
        _
    $region6: #{tpu_custom_call.1} parent=1 // loop_footer
      %s19 = sadd.s32 1, %s15
    $region7: #{tpu_custom_call.1} parent=1 // loop_footer_branch
      %14 = sbr.rel target = $region3
    $region8: #{tpu_custom_call.1} parent=1 // loop_exit
      _
    %825 = vsyncpa [#allocation5], 1
    %s826 = scalar_lea.sflag [#allocation5], 1
    %827 = vsyncpa %s826, 1

</llo_original>
